<compile_context>
chip_gen: v5e
topology: v5e:2x2
jax: 0.10.0
libtpu: 0.0.40
codegen_flags: <defaults>
</compile_context>

<pallas_src>
import functools

import numpy as np
import jax
import jax.numpy as jnp
from jax import lax
from jax.experimental import pallas as pl
from jax.experimental.pallas import tpu as pltpu


def _detection_kernel(c_ref, x_ref, o_ref, *, grid_size):
    """One (batch, spatial-tile) block per grid step.

    c_ref: (C, 5) per-channel constants [wh_mask, sign, x_mask, y_mask, scale].
    x_ref: (1, C, T) raw conv outputs, channel-major, spatial on the lane axis.
    o_ref: (1, C, T) transformed detections, same channel-major layout
           (lane-dense stores; the (B, GG, C) permute happens in the wrapper).
    """
    _, C, T = x_ref.shape
    p = x_ref[0].astype(jnp.float32)                      # (C, T)

    c = c_ref[...]                                        # (C, 5)
    wh_mask = c[:, 0:1]                                   # 1.0 on w/h rows
    sign    = c[:, 1:2]                                   # +1 on w/h rows, -1 else
    x_mask  = c[:, 2:3]                                   # 1.0 on x rows
    y_mask  = c[:, 3:4]                                   # 1.0 on y rows
    scale   = c[:, 4:5]                                   # stride / anchor / 1.0

    # Grid-cell offsets for this spatial tile.  No integer divide (TPU has no
    # HW int div): float reciprocal-multiply + floor, exact for GG << 2**24.
    # Tail lanes of a partial block may produce garbage; their store is masked
    # and nothing reduces over the tile, so that is safe.
    gsz = float(grid_size)
    start = pl.program_id(1) * T
    idx = (start + lax.broadcasted_iota(jnp.int32, (1, T), 1)).astype(jnp.float32)
    gy = jnp.floor((idx + 0.5) * (1.0 / gsz))             # (1, T)
    gx = idx - gy * gsz                                   # (1, T)

    # Dense full-tile math: one exp pass, one reciprocal, one select.
    t = jnp.exp(p * sign)                                 # exp(p) on w/h, exp(-p) else
    sig = 1.0 / (1.0 + t)                                 # == sigmoid(p) on non-w/h
    y = jnp.where(wh_mask > 0.0, t, sig)
    y = (y + x_mask * gx + y_mask * gy) * scale
    o_ref[0] = y.astype(o_ref.dtype)


def _choose_spatial_tile(GG, C, B):
    """Pick the lane-tile from a VMEM byte budget; cdiv + masked tail blocks."""
    lanes = ((GG + 127) // 128) * 128                     # whole plane, 128-aligned
    # Per lane of f32: 2x double-buffered input + 2x output blocks + ~4 live
    # (C, tile) intermediates inside the kernel.
    bytes_per_lane = C * 4 * 8
    budget = 12 * 1024 * 1024                             # < v5e 16 MiB / v7x 32 MiB scoped
    max_tile = max(512, (budget // bytes_per_lane) // 128 * 128)
    tile = min(lanes, max_tile)
    if B == 1 and lanes >= 256:
        # Guarantee >= 2 spatial programs so v7x's second TensorCore has work.
        half = ((lanes // 2 + 127) // 128) * 128
        tile = min(tile, half)
    tile = max(tile, 128)
    return tile, pl.cdiv(GG, tile)


def detection_layer_forward(x, anchors, inp_dim, num_classes):
    """Inference forward of DetectionLayer (== flattenPredict / predict_transform).

    x: (B, numAnchors*(5+numClasses), G, G) NCHW.
    Returns (B, G*G*numAnchors, 5+numClasses) float32.
    """
    B, C, G, G2 = x.shape
    assert G == G2
    nA = len(anchors)
    A = 5 + num_classes
    assert C == nA * A, f"channel mismatch: {C} != {nA * A}"
    stride = inp_dim // G
    GG = G * G
    N = GG * nA

    # Per-channel constant table (C, 5): [wh_mask, sign, x_mask, y_mask, scale].
    attr = np.arange(C) % A
    wh_mask = ((attr == 2) | (attr == 3)).astype(np.float32)
    sign = np.where(wh_mask > 0, 1.0, -1.0).astype(np.float32)
    x_mask = (attr == 0).astype(np.float32)
    y_mask = (attr == 1).astype(np.float32)
    scale = np.ones((C,), np.float32)
    for a_idx, (aw, ah) in enumerate(anchors):
        base = a_idx * A
        scale[base + 0] = float(stride)                   # (sigmoid(x)+gx)*stride
        scale[base + 1] = float(stride)                   # (sigmoid(y)+gy)*stride
        scale[base + 2] = float(aw)                       # exp(w)*(aw/stride)*stride
        scale[base + 3] = float(ah)                       # exp(h)*(ah/stride)*stride
    consts = jnp.asarray(
        np.stack([wh_mask, sign, x_mask, y_mask, scale], axis=1))   # (C, 5)

    # Free reshape: channel-major, spatial flattened onto the lane axis.
    x3 = x.reshape(B, C, GG)

    tile, n_sp = _choose_spatial_tile(GG, C, B)
    kernel = functools.partial(_detection_kernel, grid_size=G)

    out = pl.pallas_call(
        kernel,
        out_shape=jax.ShapeDtypeStruct((B, C, GG), jnp.float32),
        grid=(B, n_sp),
        in_specs=[
            pl.BlockSpec((C, 5), lambda b, s: (0, 0)),
            pl.BlockSpec((1, C, tile), lambda b, s: (b, 0, s)),
        ],
        out_specs=pl.BlockSpec((1, C, tile), lambda b, s: (b, 0, s)),
        compiler_params=pltpu.CompilerParams(
            dimension_semantics=("parallel", "parallel")),
    )(consts, x3)

    # Option (a) from the perf review: one small XLA permute outside the kernel
    # keeps all in-kernel stores lane-dense.  The final reshape is free:
    # (B, GG, nA*A) row-major == (B, GG*nA, A) row-major.
    return jnp.transpose(out, (0, 2, 1)).reshape(B, N, A)


def _reference_forward(x, anchors, inp_dim, num_classes):
    """Pure-jnp reference (mirrors predict_transform) for a correctness check."""
    B, C, G, _ = x.shape
    nA = len(anchors)
    A = 5 + num_classes
    stride = inp_dim // G
    N = G * G * nA

    pred = x.reshape(B, nA * A, G * G)
    pred = jnp.transpose(pred, (0, 2, 1)).reshape(B, N, A).astype(jnp.float32)

    grid = np.arange(G)
    a, b = np.meshgrid(grid, grid)
    xy_off = np.concatenate(
        [a.reshape(-1, 1), b.reshape(-1, 1)], axis=1
    ).astype(np.float32)
    xy_off = np.tile(xy_off, (1, nA)).reshape(-1, 2)
    scaled_anch = np.array(
        [(aw / stride, ah / stride) for (aw, ah) in anchors], dtype=np.float32
    )
    anch = np.tile(scaled_anch, (G * G, 1))

    xy = (jax.nn.sigmoid(pred[:, :, 0:2]) + xy_off[None]) * stride
    wh = jnp.exp(pred[:, :, 2:4]) * anch[None] * stride
    conf = jax.nn.sigmoid(pred[:, :, 4:5])
    cls = jax.nn.sigmoid(pred[:, :, 5:])
    return jnp.concatenate([xy, wh, conf, cls], axis=-1)


if __name__ == "__main__":
    # Small, deterministic configuration consistent with the module:
    #   3 anchors, 3 classes -> 24 channels; 16x16 feature map; inpDim=64 (stride 4)
    anchors = [(10.0, 13.0), (16.0, 30.0), (33.0, 23.0)]
    num_classes = 3
    inp_dim = 64
    B, G = 2, 16
    nA = len(anchors)
    A = 5 + num_classes

    key = jax.random.PRNGKey(0)
    x = jax.random.normal(key, (B, nA * A, G, G), dtype=jnp.float32)

    out = jax.block_until_ready(
        detection_layer_forward(x, anchors, inp_dim, num_classes)
    )
    ref = jax.block_until_ready(
        _reference_forward(x, anchors, inp_dim, num_classes)
    )
    assert out.shape == (B, G * G * nA, A), out.shape
    np.testing.assert_allclose(np.asarray(out), np.asarray(ref), rtol=1e-5, atol=1e-5)

    print("KERNEL_OK")
</pallas_src>

<mosaic_0001>
module attributes {stable_mosaic.version = 11 : i64} {
  func.func @_detection_kernel(%arg0: i32, %arg1: i32, %arg2: memref<24x5xf32, #tpu.memory_space<vmem>>, %arg3: memref<1x24x256xf32, #tpu.memory_space<vmem>>, %arg4: memref<1x24x256xf32, #tpu.memory_space<vmem>>) attributes {dimension_semantics = [#tpu.dimension_semantics<parallel>, #tpu.dimension_semantics<parallel>], iteration_bounds = array<i64: 2, 1>, scalar_prefetch = 0 : i64, scratch_operands = 0 : i64, tpu.core_type = #tpu.core_type<tc>, window_params = [{pipeline_mode = #tpu.pipeline_mode<synchronous>, transform_indices = @transform_0, window_bounds = array<i64: 24, 5>}, {transform_indices = @transform_1, window_bounds = array<i64: 1, 24, 256>}, {transform_indices = @transform_2, window_bounds = array<i64: 1, 24, 256>}]} {
    %c0 = arith.constant 0 : index
    %c0_0 = arith.constant 0 : index
    %c0_1 = arith.constant 0 : index
    %0 = vector.load %arg3[%c0, %c0_0, %c0_1] : memref<1x24x256xf32, #tpu.memory_space<vmem>>, vector<1x24x256xf32>
    %1 = vector.shape_cast %0 : vector<1x24x256xf32> to vector<24x256xf32>
    %c0_2 = arith.constant 0 : index
    %c0_3 = arith.constant 0 : index
    %2 = vector.load %arg2[%c0_2, %c0_3] : memref<24x5xf32, #tpu.memory_space<vmem>>, vector<24x5xf32>
    %3 = vector.extract_strided_slice %2 {offsets = [0, 0], sizes = [24, 1], strides = [1, 1]} : vector<24x5xf32> to vector<24x1xf32>
    %4 = vector.extract_strided_slice %2 {offsets = [0, 1], sizes = [24, 1], strides = [1, 1]} : vector<24x5xf32> to vector<24x1xf32>
    %5 = vector.extract_strided_slice %2 {offsets = [0, 2], sizes = [24, 1], strides = [1, 1]} : vector<24x5xf32> to vector<24x1xf32>
    %6 = vector.extract_strided_slice %2 {offsets = [0, 3], sizes = [24, 1], strides = [1, 1]} : vector<24x5xf32> to vector<24x1xf32>
    %7 = vector.extract_strided_slice %2 {offsets = [0, 4], sizes = [24, 1], strides = [1, 1]} : vector<24x5xf32> to vector<24x1xf32>
    %c256_i32 = arith.constant 256 : i32
    %8 = arith.muli %arg1, %c256_i32 : i32
    %9 = tpu.iota {dimensions = array<i32: 1>} : vector<1x256xi32>
    %10 = vector.broadcast %8 : i32 to vector<1x256xi32>
    %11 = arith.addi %10, %9 : vector<1x256xi32>
    %12 = arith.sitofp %11 : vector<1x256xi32> to vector<1x256xf32>
    %cst = arith.constant 5.000000e-01 : f32
    %13 = vector.broadcast %cst : f32 to vector<1x256xf32>
    %14 = arith.addf %12, %13 : vector<1x256xf32>
    %cst_4 = arith.constant 6.250000e-02 : f32
    %15 = vector.broadcast %cst_4 : f32 to vector<1x256xf32>
    %16 = arith.mulf %14, %15 : vector<1x256xf32>
    %17 = math.floor %16 : vector<1x256xf32>
    %cst_5 = arith.constant 1.600000e+01 : f32
    %18 = vector.broadcast %cst_5 : f32 to vector<1x256xf32>
    %19 = arith.mulf %17, %18 : vector<1x256xf32>
    %20 = arith.subf %12, %19 : vector<1x256xf32>
    %21 = vector.broadcast %4 : vector<24x1xf32> to vector<24x256xf32>
    %22 = arith.mulf %1, %21 : vector<24x256xf32>
    %23 = math.exp %22 : vector<24x256xf32>
    %cst_6 = arith.constant 1.000000e+00 : f32
    %24 = vector.broadcast %cst_6 : f32 to vector<24x256xf32>
    %25 = arith.addf %24, %23 : vector<24x256xf32>
    %cst_7 = arith.constant 1.000000e+00 : f32
    %26 = vector.broadcast %cst_7 : f32 to vector<24x256xf32>
    %27 = arith.divf %26, %25 : vector<24x256xf32>
    %cst_8 = arith.constant 0.000000e+00 : f32
    %28 = vector.broadcast %cst_8 : f32 to vector<24x1xf32>
    %29 = arith.cmpf ogt, %3, %28 : vector<24x1xf32>
    %30 = vector.shape_cast %29 : vector<24x1xi1> to vector<24x1xi1>
    %31 = vector.broadcast %30 : vector<24x1xi1> to vector<24x256xi1>
    %32 = arith.select %31, %23, %27 : vector<24x256xi1>, vector<24x256xf32>
    %33 = vector.broadcast %5 : vector<24x1xf32> to vector<24x256xf32>
    %34 = vector.broadcast %20 : vector<1x256xf32> to vector<24x256xf32>
    %35 = arith.mulf %33, %34 : vector<24x256xf32>
    %36 = arith.addf %32, %35 : vector<24x256xf32>
    %37 = vector.broadcast %6 : vector<24x1xf32> to vector<24x256xf32>
    %38 = vector.broadcast %17 : vector<1x256xf32> to vector<24x256xf32>
    %39 = arith.mulf %37, %38 : vector<24x256xf32>
    %40 = arith.addf %36, %39 : vector<24x256xf32>
    %41 = vector.broadcast %7 : vector<24x1xf32> to vector<24x256xf32>
    %42 = arith.mulf %40, %41 : vector<24x256xf32>
    %c0_9 = arith.constant 0 : index
    %c0_10 = arith.constant 0 : index
    %c0_11 = arith.constant 0 : index
    %43 = vector.load %arg4[%c0_9, %c0_10, %c0_11] : memref<1x24x256xf32, #tpu.memory_space<vmem>>, vector<1x24x256xf32>
    %44 = vector.shape_cast %43 : vector<1x24x256xf32> to vector<24x256xf32>
    %45 = vector.shape_cast %42 : vector<24x256xf32> to vector<1x24x256xf32>
    tpu.vector_store %arg4[%c0_9, %c0_10, %c0_11], %45 {strides = array<i32>} : memref<1x24x256xf32, #tpu.memory_space<vmem>>, vector<1x24x256xf32>,
    return
  }
  func.func @transform_0(%arg0: i32, %arg1: i32) -> (i32, i32) {
    %c0_i32 = arith.constant 0 : i32
    %c0_i32_0 = arith.constant 0 : i32
    %c0_i32_1 = arith.constant 0 : i32
    return %c0_i32, %c0_i32_0 : i32, i32
  }
  func.func @transform_1(%arg0: i32, %arg1: i32) -> (i32, i32, i32) {
    %c0_i32 = arith.constant 0 : i32
    %c0_i32_0 = arith.constant 0 : i32
    return %arg0, %c0_i32, %arg1 : i32, i32, i32
  }
  func.func @transform_2(%arg0: i32, %arg1: i32) -> (i32, i32, i32) {
    %c0_i32 = arith.constant 0 : i32
    %c0_i32_0 = arith.constant 0 : i32
    return %arg0, %c0_i32, %arg1 : i32, i32, i32
  }
}

</mosaic_0001>

<llo_original>
// kernel: tpu_custom_call.1
$region0: #{tpu_custom_call.1}
  #allocation0 [shape = 'u32[]', space=smem, size = 0x4, offset = 0x4, fixed_abs, tag = 'smem constant byte address 0x4 - core index']
  #allocation1 [shape = 'u32[72,128]{1,0:T(1,128)}', space=vmem, size = 0x9000, scoped, tag = 'internal scratch']
  %s0 = inlined_call_operand.vmem [shape: f32[24,5], index: 0, kind: input, shape index: {}]
  %s1 = inlined_call_operand.hbm [shape: f32[2,24,256], index: 1, kind: input, shape index: {}]
  %s2 = inlined_call_operand.hbm [shape: f32[2,24,256], index: 2, kind: output, shape index: {}]
  %s3 = sld [smem:[#allocation0]]
  $region45: #{tpu_custom_call.1} parent=0
    _
  %s5 = ssub.s32 1, %s3
  %s6 = scalar_select 0, %s5, %s3
  $region1: #{tpu_custom_call.1} parent=0
    #allocation2 [shape = 'u8[49152]{0}', space=vmem, size = 0xc000, scoped, tag = 'input window, operand 1']
    #allocation3 [shape = 's32[2]{0}', space=sflag, size = 0x8, scoped, tag = 'scoped memory for tpu_custom_call.1']
    #allocation4 [shape = 's32[2]{0}', space=sflag, size = 0x8, scoped, tag = 'scoped memory for tpu_custom_call.1']
    #allocation5 [shape = 'u8[49152]{0}', space=vmem, size = 0xc000, scoped, tag = 'output window, operand 0']
    %7 = vsyncpa [#allocation3], 0
    %s8 = scalar_lea.sflag [#allocation3], 1
    %9 = vsyncpa %s8, 0
    %10 = vsyncpa [#allocation4], 0
    %s11 = scalar_lea.sflag [#allocation4], 1
    %12 = vsyncpa %s11, 0
    loop: start=0, step=1, limit=4
    $region2: #{tpu_custom_call.1} parent=1 // loop_pre_header
      _
    $region3: #{tpu_custom_call.1} parent=1 // loop_header
      %s14 = sphi 0, %s18
      %p15 = scmp.ge.s32.totalorder %s14, 4
      %s21 = sphi 0, %s33
      %s22 = sphi 0, %s29
      %s23 = sphi 0, %s21
      %s24 = sphi 0, %s22
      %s25 = sphi 0, %s23
      %s26 = sphi 0, %s24
      %s34 = sphi 0, %s34
      %s36 = sphi 0, %s34
      %s37 = sphi 0, %s36
      %s51 = sphi 0, %s37
      %s59 = sphi 0, %s61
      %s62 = sphi 0, %s59
      %s63 = sphi 0, %s62
      %s79 = sphi 0, %s63
      %s87 = sphi 0, %s89
      %s90 = sphi 0, %s87
      %s91 = sphi 0, %s90
      %s107 = sphi 0, %s91
    $region4: #{tpu_custom_call.1} parent=1 // loop_header_branch
      %17 = sbr.rel (%p15) target = $region8
    $region5: #{tpu_custom_call.1} parent=1 // loop_body
      %s19 = ssub.s32 %s14, 1
      %s20 = ssub.s32 %s14, 2
      %s27 = sadd.s32 1, %s22
      %p28 = scmp.ge.s32.totalorder %s27, 1
      %s29 = scalar_select %p28, 0, %s27
      %s30 = sadd.s32 1, %s21
      %s31 = scalar_select %p28, %s30, %s21
      %p32 = scmp.ge.s32.totalorder %s31, 2
      %s33 = scalar_select %p32, 0, %s31
      %s35 = sadd.s32 %s34, 1
      %p38 = scmp.eq.s32.totalorder %s14, 1
      %p39 = scmp.ne.s32.totalorder %s34, %s36
      %p40 = scmp.eq.s32.totalorder %s14, 0
      %p41 = por %p39, %p40
      %p42 = scmp.ne.s32.totalorder %s34, %s36
      %p43 = scmp.eq.s32.totalorder %s19, 1
      %p44 = por %p42, %p43
      %p45 = scmp.ne.s32.totalorder %s36, %s37
      %p46 = scmp.eq.s32.totalorder %s19, 0
      %p47 = por %p45, %p46
      %p48 = scmp.ne.s32.totalorder %s36, %s37
      %p49 = scmp.eq.s32.totalorder %s20, 1
      %p50 = por %p48, %p49
      %p52 = scmp.ne.s32.totalorder %s37, %s51
      %p53 = scmp.eq.s32.totalorder %s20, 0
      %p54 = por %p52, %p53
      %s55 = ssub.s32 %s21, %s33
      %s56 = ssub.s32 %s22, %s29
      %s57 = sor.u32 %s55, %s56
      %p58 = scmp.eq.s32.totalorder %s57, 0
      %s60 = sadd.s32 %s59, 1
      %s61 = scalar_select %p58, %s59, %s60
      %p64 = pneg %p58
      %p65 = scmp.eq.s32.totalorder %s14, 1
      %p66 = por %p64, %p65
      %p67 = scmp.ne.s32.totalorder %s59, %s62
      %p68 = scmp.eq.s32.totalorder %s14, 0
      %p69 = por %p67, %p68
      %p70 = scmp.ne.s32.totalorder %s59, %s62
      %p71 = scmp.eq.s32.totalorder %s19, 1
      %p72 = por %p70, %p71
      %p73 = scmp.ne.s32.totalorder %s62, %s63
      %p74 = scmp.eq.s32.totalorder %s19, 0
      %p75 = por %p73, %p74
      %p76 = scmp.ne.s32.totalorder %s62, %s63
      %p77 = scmp.eq.s32.totalorder %s20, 1
      %p78 = por %p76, %p77
      %p80 = scmp.ne.s32.totalorder %s63, %s79
      %p81 = scmp.eq.s32.totalorder %s20, 0
      %p82 = por %p80, %p81
      %s83 = ssub.s32 %s21, %s33
      %s84 = ssub.s32 %s22, %s29
      %s85 = sor.u32 %s83, %s84
      %p86 = scmp.eq.s32.totalorder %s85, 0
      %s88 = sadd.s32 %s87, 1
      %s89 = scalar_select %p86, %s87, %s88
      %p92 = pneg %p86
      %p93 = scmp.eq.s32.totalorder %s14, 1
      %p94 = por %p92, %p93
      %p95 = scmp.ne.s32.totalorder %s87, %s90
      %p96 = scmp.eq.s32.totalorder %s14, 0
      %p97 = por %p95, %p96
      %p98 = scmp.ne.s32.totalorder %s87, %s90
      %p99 = scmp.eq.s32.totalorder %s19, 1
      %p100 = por %p98, %p99
      %p101 = scmp.ne.s32.totalorder %s90, %s91
      %p102 = scmp.eq.s32.totalorder %s19, 0
      %p103 = por %p101, %p102
      %p104 = scmp.ne.s32.totalorder %s90, %s91
      %p105 = scmp.eq.s32.totalorder %s20, 1
      %p106 = por %p104, %p105
      %p108 = scmp.ne.s32.totalorder %s91, %s107
      %p109 = scmp.eq.s32.totalorder %s20, 0
      %p110 = por %p108, %p109
      %p111 = scmp.le.s32.totalorder 1, %s14
      %p112 = scmp.lt.s32.totalorder %s14, 3
      %p113 = pnand %p111, %p112
      %p114 = pneg %p113
      // Predicated region
      $region9: #{tpu_custom_call.1} parent=5 // pred_check
        _
      $region10: #{tpu_custom_call.1} parent=5 // pred_check_branch
        %116 = sbr.rel (%p113) target = $region12
      $region11: #{tpu_custom_call.1} parent=5 // pred_region
        %s117 = ssub.s32 %s14, 1
        // Predicated region
        $region13: #{tpu_custom_call.1} parent=11 // pred_check
          %p118 = pneg %p47
        $region14: #{tpu_custom_call.1} parent=11 // pred_check_branch
          %120 = sbr.rel (%p118) target = $region16
        $region15: #{tpu_custom_call.1} parent=11 // pred_region
          _
        $region16: #{tpu_custom_call.1} parent=11 // pred_fallthru
          _
      $region12: #{tpu_custom_call.1} parent=5 // pred_fallthru
        _
      %p121 = scmp.lt.s32.totalorder %s14, 2
      // Predicated region
      $region17: #{tpu_custom_call.1} parent=5 // pred_check
        %p122 = pneg %p121
      $region18: #{tpu_custom_call.1} parent=5 // pred_check_branch
        %124 = sbr.rel (%p122) target = $region20
      $region19: #{tpu_custom_call.1} parent=5 // pred_region
        // Predicated region
        $region21: #{tpu_custom_call.1} parent=19 // pred_check
          %p125 = pneg %p69
        $region22: #{tpu_custom_call.1} parent=19 // pred_check_branch
          %127 = sbr.rel (%p125) target = $region24
        $region23: #{tpu_custom_call.1} parent=19 // pred_region
          %s128 = sand.u32 %s59, 1
          %s129 = scalar_lea.sflag [#allocation3], %s128
          %s130 = sand.u32 %s59, 1
          %s131 = smul.addr %s130, 48
          %s132 = scalar_lea.vmem [#allocation2], %s131
          %s133 = smul.u32 2, %s22
          %135 = vsyncadd %s129, 0
          %s136 = smul.addr %s21, 6
          %s137 = sadd.s32 %s133, %s136
          %s138 = smul.addr %s137, 8
          %s139 = scalar_lea.hbm %s1, %s138
          %s140 = sshll.u32 %s139, 4
          %s141 = int_to_ptr.hbm [resolvable:$true] %s140
          %s142 = sshll.u32 %s132, 4
          %s143 = int_to_ptr.vmem [resolvable:$true] %s142
          %148 = dma.hbm_to_vmem [thread:$0]  %s141, 768, %s143, %s129, 256, 256, 16
        $region24: #{tpu_custom_call.1} parent=19 // pred_fallthru
          _
      $region20: #{tpu_custom_call.1} parent=5 // pred_fallthru
        _
      %p149 = scmp.le.s32.totalorder 1, %s14
      %p150 = scmp.lt.s32.totalorder %s14, 3
      %p151 = pnand %p149, %p150
      %p152 = pneg %p151
      // Predicated region
      $region25: #{tpu_custom_call.1} parent=5 // pred_check
        _
      $region26: #{tpu_custom_call.1} parent=5 // pred_check_branch
        %154 = sbr.rel (%p151) target = $region28
      $region27: #{tpu_custom_call.1} parent=5 // pred_region
        %s155 = ssub.s32 %s14, 1
        %s156 = sand.u32 %s62, 1
        %s157 = scalar_lea.sflag [#allocation3], %s156
        %s158 = sand.u32 %s62, 1
        %s159 = smul.addr %s158, 48
        %s160 = scalar_lea.vmem [#allocation2], %s159
        // Predicated region
        $region29: #{tpu_custom_call.1} parent=27 // pred_check
          %p161 = pneg %p75
        $region30: #{tpu_custom_call.1} parent=27 // pred_check_branch
          %163 = sbr.rel (%p161) target = $region32
        $region31: #{tpu_custom_call.1} parent=27 // pred_region
          %165 = dma.done %s157, 768
        $region32: #{tpu_custom_call.1} parent=27 // pred_fallthru
          _
        %p166 = pneg %p47
        %p167 = pneg %p44
        %s168 = sand.u32 %s62, 1
        %s169 = scalar_lea.sflag [#allocation3], %s168
        %s170 = sand.u32 %s62, 1
        %s171 = smul.addr %s170, 48
        %s172 = scalar_lea.vmem [#allocation2], %s171
        %p173 = pneg %p75
        %p174 = pneg %p72
        %p175 = pneg %p103
        %p176 = pneg %p100
        %s177 = sand.u32 %s90, 1
        %s178 = scalar_lea.sflag [#allocation4], %s177
        %s179 = sand.u32 %s90, 1
        %s180 = smul.addr %s179, 48
        %s181 = scalar_lea.vmem [#allocation5], %s180
        %s182 = smul.u32 2, %s24
        %s183 = smul.u32 2, %s24
        %v184 = vld [vmem:[%s160] sm:$0xff]
        %v185 = vld [vmem:[%s160 + $0x8] sm:$0xff]
        %v186 = vld [vmem:[%s160 + $0x10] sm:$0xff]
        %v187 = vld [vmem:[%s160 + $0x18] sm:$0xff]
        %v188 = vld [vmem:[%s160 + $0x20] sm:$0xff]
        %v189 = vld [vmem:[%s160 + $0x28] sm:$0xff]
        %v190 = vld [vmem:[%s0] sm:$0xff]
        %v191 = vld [vmem:[%s0 + $0x8] sm:$0xff]
        %v192 = vld [vmem:[%s0 + $0x10] sm:$0xff]
        %s193 = smul.u32 %s24, 256
        %v194 = vlaneseq
        %v195 = vand.u32 %v194, 127
        %v196 = vadd.s32 %v195, 128
        %v197 = vstv %s193
        %v198 = vadd.s32 %v197, %v195
        %v199 = vadd.s32 %v197, %v196
        %v200 = vcvt.s32.f32 %v198
        %v201 = vcvt.s32.f32 %v199
        %v202 = vadd.f32 %v200, 0.5
        %v203 = vadd.f32 %v201, 0.5
        %v204 = vmul.f32 %v202, 0.0625
        %v205 = vmul.f32 %v203, 0.0625
        %v206 = vfloor.f32 %v204
        %v207 = vfloor.f32 %v205
        %v208 = vmul.f32 %v206, 16.0
        %v209 = vmul.f32 %v207, 16.0
        %v210 = vsub.f32 %v200, %v208
        %v211 = vsub.f32 %v201, %v209
        %213 = vset.pattern.permute.xlu0 1
        %214 = vperm.xlu0 %213, %v190
        %v215 = vpop.permute.xlu0 %214
        %218 = vset.pattern.permute.xlu0 1
        %219 = vperm.xlu0 %218, %v191
        %v220 = vpop.permute.xlu0 %219
        %223 = vset.pattern.permute.xlu0 1
        %224 = vperm.xlu0 %223, %v192
        %v225 = vpop.permute.xlu0 %224
        %v227 = vmul.f32 %v184, %v215
        %v228 = vmul.f32 %v185, %v215
        %v229 = vmul.f32 %v186, %v220
        %v230 = vmul.f32 %v187, %v220
        %v231 = vmul.f32 %v188, %v225
        %v232 = vmul.f32 %v189, %v225
        %v233 = vmul.f32 %v227, 1.442695
        %v234 = vpow.pop %v233
        %v235 = vmul.f32 %v228, 1.442695
        %v236 = vpow.pop %v235
        %v237 = vmul.f32 %v229, 1.442695
        %v238 = vpow.pop %v237
        %v239 = vmul.f32 %v230, 1.442695
        %v240 = vpow.pop %v239
        %v241 = vmul.f32 %v231, 1.442695
        %v242 = vpow.pop %v241
        %v243 = vmul.f32 %v232, 1.442695
        %v244 = vpow.pop %v243
        %v245 = vadd.f32 %v234, 1.0
        %v246 = vadd.f32 %v236, 1.0
        %v247 = vadd.f32 %v238, 1.0
        %v248 = vadd.f32 %v240, 1.0
        %v249 = vadd.f32 %v242, 1.0
        %v250 = vadd.f32 %v244, 1.0
        %v251 = vrcp.pop %v245
        %v252 = vmul.f32 %v245, %v251
        %v253 = vsub.f32 1.0, %v252
        %v254 = vmul.f32 %v251, %v253
        %v255 = vadd.f32 %v251, %v254
        %vm256 = vweird.f32 %v245
        %vm257 = vweird.f32 %v251
        %vm258 = vmor %vm256, %vm257
        %v259 = vsel %vm258, %v251, %v255
        %v260 = vand.u32 2147483647, %v245
        %vm261 = vcmp.eq.f32.partialorder %v260, 8.507059e+37
        %v262 = vand.u32 %v245, 2147483648
        %v263 = vor.u32 1.1754944e-38, %v262
        %v264 = vsel %vm261, %v263, %v259
        %v265 = vmul.f32 1.0, %v264
        %v266 = vrcp.pop %v246
        %v267 = vmul.f32 %v246, %v266
        %v268 = vsub.f32 1.0, %v267
        %v269 = vmul.f32 %v266, %v268
        %v270 = vadd.f32 %v266, %v269
        %vm271 = vweird.f32 %v246
        %vm272 = vweird.f32 %v266
        %vm273 = vmor %vm271, %vm272
        %v274 = vsel %vm273, %v266, %v270
        %v275 = vand.u32 2147483647, %v246
        %vm276 = vcmp.eq.f32.partialorder %v275, 8.507059e+37
        %v277 = vand.u32 %v246, 2147483648
        %v278 = vor.u32 1.1754944e-38, %v277
        %v279 = vsel %vm276, %v278, %v274
        %v280 = vmul.f32 1.0, %v279
        %v281 = vrcp.pop %v247
        %v282 = vmul.f32 %v247, %v281
        %v283 = vsub.f32 1.0, %v282
        %v284 = vmul.f32 %v281, %v283
        %v285 = vadd.f32 %v281, %v284
        %vm286 = vweird.f32 %v247
        %vm287 = vweird.f32 %v281
        %vm288 = vmor %vm286, %vm287
        %v289 = vsel %vm288, %v281, %v285
        %v290 = vand.u32 2147483647, %v247
        %vm291 = vcmp.eq.f32.partialorder %v290, 8.507059e+37
        %v292 = vand.u32 %v247, 2147483648
        %v293 = vor.u32 1.1754944e-38, %v292
        %v294 = vsel %vm291, %v293, %v289
        %v295 = vmul.f32 1.0, %v294
        %v296 = vrcp.pop %v248
        %v297 = vmul.f32 %v248, %v296
        %v298 = vsub.f32 1.0, %v297
        %v299 = vmul.f32 %v296, %v298
        %v300 = vadd.f32 %v296, %v299
        %vm301 = vweird.f32 %v248
        %vm302 = vweird.f32 %v296
        %vm303 = vmor %vm301, %vm302
        %v304 = vsel %vm303, %v296, %v300
        %v305 = vand.u32 2147483647, %v248
        %vm306 = vcmp.eq.f32.partialorder %v305, 8.507059e+37
        %v307 = vand.u32 %v248, 2147483648
        %v308 = vor.u32 1.1754944e-38, %v307
        %v309 = vsel %vm306, %v308, %v304
        %v310 = vmul.f32 1.0, %v309
        %v311 = vrcp.pop %v249
        %v312 = vmul.f32 %v249, %v311
        %v313 = vsub.f32 1.0, %v312
        %v314 = vmul.f32 %v311, %v313
        %v315 = vadd.f32 %v311, %v314
        %vm316 = vweird.f32 %v249
        %vm317 = vweird.f32 %v311
        %vm318 = vmor %vm316, %vm317
        %v319 = vsel %vm318, %v311, %v315
        %v320 = vand.u32 2147483647, %v249
        %vm321 = vcmp.eq.f32.partialorder %v320, 8.507059e+37
        %v322 = vand.u32 %v249, 2147483648
        %v323 = vor.u32 1.1754944e-38, %v322
        %v324 = vsel %vm321, %v323, %v319
        %v325 = vmul.f32 1.0, %v324
        %v326 = vrcp.pop %v250
        %v327 = vmul.f32 %v250, %v326
        %v328 = vsub.f32 1.0, %v327
        %v329 = vmul.f32 %v326, %v328
        %v330 = vadd.f32 %v326, %v329
        %vm331 = vweird.f32 %v250
        %vm332 = vweird.f32 %v326
        %vm333 = vmor %vm331, %vm332
        %v334 = vsel %vm333, %v326, %v330
        %v335 = vand.u32 2147483647, %v250
        %vm336 = vcmp.eq.f32.partialorder %v335, 8.507059e+37
        %v337 = vand.u32 %v250, 2147483648
        %v338 = vor.u32 1.1754944e-38, %v337
        %v339 = vsel %vm336, %v338, %v334
        %v340 = vmul.f32 1.0, %v339
        %vm341 = vcmp.gt.f32.partialorder %v190, 0.0
        %vm342 = vcmp.gt.f32.partialorder %v191, 0.0
        %vm343 = vcmp.gt.f32.partialorder %v192, 0.0
        %v344 = vsel %vm341, 1, 0
        %v345 = vsel %vm342, 1, 0
        %v346 = vsel %vm343, 1, 0
        %347 = vset.pattern.permute.xlu0 0
        %348 = vperm.xlu0 %347, %v344
        %v349 = vpop.permute.xlu0 %348
        %350 = vset.pattern.permute.xlu0 0
        %351 = vperm.xlu0 %350, %v345
        %v352 = vpop.permute.xlu0 %351
        %353 = vset.pattern.permute.xlu0 0
        %354 = vperm.xlu0 %353, %v346
        %v355 = vpop.permute.xlu0 %354
        %vm356 = vcmp.eq.s32.totalorder %v349, 1
        %vm357 = vcmp.eq.s32.totalorder %v352, 1
        %vm358 = vcmp.eq.s32.totalorder %v355, 1
        %v359 = vsel %vm356, %v234, %v265
        %v360 = vsel %vm356, %v236, %v280
        %v361 = vsel %vm357, %v238, %v295
        %v362 = vsel %vm357, %v240, %v310
        %v363 = vsel %vm358, %v242, %v325
        %v364 = vsel %vm358, %v244, %v340
        %365 = vset.pattern.permute.xlu0 2
        %366 = vperm.xlu0 %365, %v190
        %v367 = vpop.permute.xlu0 %366
        %369 = vset.pattern.permute.xlu0 2
        %370 = vperm.xlu0 %369, %v191
        %v371 = vpop.permute.xlu0 %370
        %373 = vset.pattern.permute.xlu0 2
        %374 = vperm.xlu0 %373, %v192
        %v375 = vpop.permute.xlu0 %374
        %v377 = vmul.f32 %v367, %v210
        %v378 = vmul.f32 %v367, %v211
        %v379 = vmul.f32 %v371, %v210
        %v380 = vmul.f32 %v371, %v211
        %v381 = vmul.f32 %v375, %v210
        %v382 = vmul.f32 %v375, %v211
        %v383 = vadd.f32 %v359, %v377
        %v384 = vadd.f32 %v360, %v378
        %v385 = vadd.f32 %v361, %v379
        %v386 = vadd.f32 %v362, %v380
        %v387 = vadd.f32 %v363, %v381
        %v388 = vadd.f32 %v364, %v382
        %389 = vset.pattern.permute.xlu0 3
        %390 = vperm.xlu0 %389, %v190
        %v391 = vpop.permute.xlu0 %390
        %393 = vset.pattern.permute.xlu0 3
        %394 = vperm.xlu0 %393, %v191
        %v395 = vpop.permute.xlu0 %394
        %397 = vset.pattern.permute.xlu0 3
        %398 = vperm.xlu0 %397, %v192
        %v399 = vpop.permute.xlu0 %398
        %v401 = vmul.f32 %v391, %v206
        %v402 = vmul.f32 %v391, %v207
        %v403 = vmul.f32 %v395, %v206
        %v404 = vmul.f32 %v395, %v207
        %v405 = vmul.f32 %v399, %v206
        %v406 = vmul.f32 %v399, %v207
        %v407 = vadd.f32 %v383, %v401
        %v408 = vadd.f32 %v384, %v402
        %v409 = vadd.f32 %v385, %v403
        %v410 = vadd.f32 %v386, %v404
        %v411 = vadd.f32 %v387, %v405
        %v412 = vadd.f32 %v388, %v406
        %413 = vset.pattern.permute.xlu0 4
        %414 = vperm.xlu0 %413, %v190
        %v415 = vpop.permute.xlu0 %414
        %417 = vset.pattern.permute.xlu0 4
        %418 = vperm.xlu0 %417, %v191
        %v419 = vpop.permute.xlu0 %418
        %421 = vset.pattern.permute.xlu0 4
        %422 = vperm.xlu0 %421, %v192
        %v423 = vpop.permute.xlu0 %422
        %v425 = vmul.f32 %v407, %v415
        %v426 = vmul.f32 %v408, %v415
        %v427 = vmul.f32 %v409, %v419
        %v428 = vmul.f32 %v410, %v419
        %v429 = vmul.f32 %v411, %v423
        %v430 = vmul.f32 %v412, %v423
        %431 = vst [vmem:[%s181] sm:$0xff] %v425
        %432 = vst [vmem:[%s181 + $0x8] sm:$0xff] %v426
        %433 = vst [vmem:[%s181 + $0x10] sm:$0xff] %v427
        %434 = vst [vmem:[%s181 + $0x18] sm:$0xff] %v428
        %435 = vst [vmem:[%s181 + $0x20] sm:$0xff] %v429
        %436 = vst [vmem:[%s181 + $0x28] sm:$0xff] %v430
        %s437 = sand.u32 %s90, 1
        %s438 = scalar_lea.sflag [#allocation4], %s437
        %s439 = sand.u32 %s90, 1
        %s440 = smul.addr %s439, 48
        %s441 = scalar_lea.vmem [#allocation5], %s440
        // Predicated region
        $region33: #{tpu_custom_call.1} parent=27 // pred_check
          %p442 = pneg %p100
        $region34: #{tpu_custom_call.1} parent=27 // pred_check_branch
          %444 = sbr.rel (%p442) target = $region36
        $region35: #{tpu_custom_call.1} parent=27 // pred_region
          %s445 = smul.u32 2, %s24
          %447 = vsyncadd %s438, 0
          %s448 = smul.addr %s23, 6
          %s449 = sadd.s32 %s445, %s448
          %s450 = smul.addr %s449, 8
          %s451 = scalar_lea.hbm %s2, %s450
          %s452 = sshll.u32 %s441, 4
          %s453 = int_to_ptr.vmem [resolvable:$true] %s452
          %s454 = sshll.u32 %s451, 4
          %s455 = int_to_ptr.hbm [resolvable:$true] %s454
          %460 = dma.vmem_to_hbm [thread:$0]  %s453, 768, %s455, %s438, 256, 256, 16
        $region36: #{tpu_custom_call.1} parent=27 // pred_fallthru
          _
      $region28: #{tpu_custom_call.1} parent=5 // pred_fallthru
        _
      %p461 = scmp.le.s32.totalorder 2, %s14
      // Predicated region
      $region37: #{tpu_custom_call.1} parent=5 // pred_check
        %p462 = pneg %p461
      $region38: #{tpu_custom_call.1} parent=5 // pred_check_branch
        %464 = sbr.rel (%p462) target = $region40
      $region39: #{tpu_custom_call.1} parent=5 // pred_region
        %s465 = ssub.s32 %s14, 2
        // Predicated region
        $region41: #{tpu_custom_call.1} parent=39 // pred_check
          %p466 = pneg %p106
        $region42: #{tpu_custom_call.1} parent=39 // pred_check_branch
          %468 = sbr.rel (%p466) target = $region44
        $region43: #{tpu_custom_call.1} parent=39 // pred_region
          %s469 = sand.u32 %s91, 1
          %s470 = scalar_lea.sflag [#allocation4], %s469
          %s471 = sand.u32 %s91, 1
          %s472 = smul.addr %s471, 48
          %s473 = scalar_lea.vmem [#allocation5], %s472
          %475 = dma.done %s470, 768
        $region44: #{tpu_custom_call.1} parent=39 // pred_fallthru
          _
      $region40: #{tpu_custom_call.1} parent=5 // pred_fallthru
        _
    $region6: #{tpu_custom_call.1} parent=1 // loop_footer
      %s18 = sadd.s32 1, %s14
    $region7: #{tpu_custom_call.1} parent=1 // loop_footer_branch
      %13 = sbr.rel target = $region3
    $region8: #{tpu_custom_call.1} parent=1 // loop_exit
      _
    %476 = vsyncpa [#allocation3], 1
    %s477 = scalar_lea.sflag [#allocation3], 1
    %478 = vsyncpa %s477, 1
    %479 = vsyncpa [#allocation4], 1
    %s480 = scalar_lea.sflag [#allocation4], 1
    %481 = vsyncpa %s480, 1

</llo_original>
